<compile_context>
chip_gen: v5e
topology: v5e:2x2
jax: 0.10.0
libtpu: 0.0.40
codegen_flags: <defaults>
</compile_context>

<pallas_src>
import jax
import jax.numpy as jnp
from jax.experimental import pallas as pl
from jax.experimental.pallas import tpu as pltpu


def _round_up(x, m):
    return ((x + m - 1) // m) * m


def _patch_embed_kernel(x_ref, w_ref, b_ref, o_ref):
    # x_ref: (tile_m, K)      compute-dtype patches
    # w_ref: (K, tile_e)      compute-dtype flattened conv weight (transposed)
    # b_ref: (1, tile_e)      f32 bias
    # o_ref: (tile_m, tile_e) output tile
    acc = jnp.dot(x_ref[...], w_ref[...], preferred_element_type=jnp.float32)  # MXU
    o_ref[...] = (acc + b_ref[...]).astype(o_ref.dtype)


def patch_embedding(x, weight, bias, patch_size, *, tile_m=512, tile_e=512,
                    compute_dtype=jnp.bfloat16, out_dtype=None,
                    weight_resident_bytes=8 * 1024 * 1024):
    """ViT patch embedding: nn.Conv2d(C, E, p, stride=p) -> flatten(2) -> transpose(1, 2).

    x: (B, C, H, W) NCHW; weight: (E, C, p, p); bias: (E,).
    Returns (B, N, E), N = (H//p) * (W//p).

    tile_m: multiple of 8 (512-1024 typical).  tile_e only matters on the
    large-E fallback path; multiples of 256 fill the v6e/v7x MXU, 128 suffices
    for v5e.  compute_dtype=float32 opts out of the bf16 precision tradeoff;
    out_dtype=jnp.bfloat16 halves output-store bytes when downstream allows.
    """
    B, C, H, W = x.shape
    E = weight.shape[0]
    p = patch_size
    Hp, Wp = H // p, W // p
    # Conv2d(stride=kernel) semantics: ragged edge pixels are silently dropped.
    if (Hp * p, Wp * p) != (H, W):
        x = x[:, :, :Hp * p, :Wp * p]
    N = Hp * Wp
    K = C * p * p
    M = B * N
    if out_dtype is None:
        out_dtype = x.dtype
    cdt = jnp.dtype(compute_dtype)
    odt = jnp.dtype(out_dtype)

    # Cast to the (narrow) compute dtype before any data movement so the
    # im2col transpose and kernel DMAs move half the bytes (mem-bound op);
    # accumulation stays f32 on the MXU and the bias is added in f32.
    x = x.astype(compute_dtype)
    # im2col (pure layout, done by XLA -- see TODO at top):
    # (B,C,Hp,p,Wp,p) -> (B,Hp,Wp,C,p,p) -> (M, K)
    patches = x.reshape(B, C, Hp, p, Wp, p).transpose(0, 2, 4, 1, 3, 5).reshape(M, K)

    # Conv weight (E,C,p,p) -> (K,E); bias stays f32 (added post-accumulation).
    w_mat = weight.reshape(E, K).T.astype(compute_dtype)
    b_mat = bias.astype(jnp.float32).reshape(1, E)

    # Sublane-aligned M tiles over a *ragged* grid: no jnp.pad of the patch
    # matrix, no output slice along M -- Pallas masks the last block's stores.
    tile_m = min(tile_m, _round_up(M, 8))
    m_tiles = pl.cdiv(M, tile_m)

    weight_bytes = K * E * cdt.itemsize
    resident = weight_bytes <= weight_resident_bytes

    if resident:
        # Path A (the ViT case): weight + bias fully resident in VMEM, 1-D grid
        # over M tiles.  Patches and weight are each read from HBM exactly once.
        # Block last dims equal the full array dims (K, E), so no 128-padding
        # of E is needed and there is no post-call slice at all.
        grid = (m_tiles,)
        in_specs = [
            pl.BlockSpec((tile_m, K), lambda m: (m, 0)),          # streamed
            pl.BlockSpec((K, E), lambda m: (0, 0),
                         pipeline_mode=pl.Buffered(1)),           # resident
            pl.BlockSpec((1, E), lambda m: (0, 0),
                         pipeline_mode=pl.Buffered(1)),           # resident
        ]
        out_specs = pl.BlockSpec((tile_m, E), lambda m: (m, 0))
        out_shape = jax.ShapeDtypeStruct((M, E), out_dtype)
        dim_sem = ("parallel",)
        tile_e_eff = E
        e_pad = E
    else:
        # Path B (very large E): tile E, but keep M as the OUTER grid axis so
        # the big (tile_m, K) patch tile is fetched once per M tile (its block
        # index is constant across the inner e axis -> re-DMA elided) and only
        # the small (K, tile_e) weight tile is re-fetched per step.
        tile_e_eff = max(128, min(_round_up(tile_e, 128), _round_up(E, 128)))
        e_pad = _round_up(E, tile_e_eff)
        if e_pad != E:
            w_mat = jnp.pad(w_mat, ((0, 0), (0, e_pad - E)))
            b_mat = jnp.pad(b_mat, ((0, 0), (0, e_pad - E)))
        grid = (m_tiles, e_pad // tile_e_eff)
        in_specs = [
            pl.BlockSpec((tile_m, K), lambda m, e: (m, 0)),
            pl.BlockSpec((K, tile_e_eff), lambda m, e: (0, e)),
            pl.BlockSpec((1, tile_e_eff), lambda m, e: (0, e)),
        ]
        out_specs = pl.BlockSpec((tile_m, tile_e_eff), lambda m, e: (m, e))
        out_shape = jax.ShapeDtypeStruct((M, e_pad), out_dtype)
        dim_sem = ("parallel", "parallel")

    # VMEM budget from the actual tile working set (double-buffered patches and
    # output, single/double weight+bias), 2x headroom, capped at 48 MiB so the
    # v7x TensorCore (64 MiB physical VMEM) keeps room for compiler scratch.
    working_set = (2 * tile_m * K * cdt.itemsize
                   + (1 if resident else 2) * K * tile_e_eff * cdt.itemsize
                   + 2 * tile_e_eff * 4
                   + 2 * tile_m * tile_e_eff * odt.itemsize)
    vmem_limit = int(min(max(2 * working_set, 16 * 1024 * 1024),
                         48 * 1024 * 1024))

    out = pl.pallas_call(
        _patch_embed_kernel,
        out_shape=out_shape,
        grid_spec=pltpu.PrefetchScalarGridSpec(
            num_scalar_prefetch=0,
            grid=grid,
            in_specs=in_specs,
            out_specs=out_specs,
        ),
        compiler_params=pltpu.CompilerParams(
            dimension_semantics=dim_sem,
            vmem_limit_bytes=vmem_limit,
        ),
    )(patches, w_mat, b_mat)

    if e_pad != E:
        out = out[:, :E]
    return out.reshape(B, N, E)


if __name__ == "__main__":
    # Small correctness shapes consistent with the module: B=2, C=4, H=W=16,
    # patch=4, embed=32.  (Perf conclusions need real ViT shapes, e.g.
    # B>=8, 224x224, p=16, E=768 -- at these demo shapes the grid is ~1 step.)
    B, C, H, W = 2, 4, 16, 16
    patch_size = 4
    embed_dim = 32

    key = jax.random.PRNGKey(0)
    kx, kw, kb = jax.random.split(key, 3)

    x = jax.random.normal(kx, (B, C, H, W), dtype=jnp.float32)
    # Deterministic synthetic conv params (shapes match nn.Conv2d(C, E, p, p)).
    fan_in = C * patch_size * patch_size
    bound = 1.0 / (fan_in ** 0.5)
    weight = jax.random.uniform(kw, (embed_dim, C, patch_size, patch_size),
                                dtype=jnp.float32, minval=-bound, maxval=bound)
    bias = jax.random.uniform(kb, (embed_dim,), dtype=jnp.float32,
                              minval=-bound, maxval=bound)

    # Reference: same math in plain-JAX f32 (kernel uses bf16 inputs, f32 acc).
    Hp, Wp = H // patch_size, W // patch_size
    patches_ref = x.reshape(B, C, Hp, patch_size, Wp, patch_size) \
                   .transpose(0, 2, 4, 1, 3, 5).reshape(B, Hp * Wp, -1)
    ref = patches_ref @ weight.reshape(embed_dim, -1).T + bias

    def check(out):
        out = jax.block_until_ready(out)
        assert out.shape == (B, Hp * Wp, embed_dim)
        # bf16 inputs / f32 accumulation: expected abs error is O(1e-3) here.
        assert jnp.allclose(out, ref, atol=5e-2, rtol=5e-2), \
            f"max abs diff = {float(jnp.max(jnp.abs(out - ref)))}"
        return out

    # Path A: weight fully resident, 1-D grid over M tiles (the ViT regime).
    out = check(patch_embedding(x, weight, bias, patch_size))
    assert out.dtype == x.dtype

    # Ragged-M coverage: tile_m=24 does not divide M=32 -> masked last block
    # (exercises the no-pad / no-slice path).
    check(patch_embedding(x, weight, bias, patch_size, tile_m=24))

    # Path B coverage: force the large-E fallback (M-outer / E-inner grid).
    check(patch_embedding(x, weight, bias, patch_size, weight_resident_bytes=0))

    print("KERNEL_OK")
</pallas_src>

<mosaic_0001>
module attributes {stable_mosaic.version = 11 : i64} {
  func.func @_patch_embed_kernel(%arg0: i32, %arg1: memref<32x64xbf16, #tpu.memory_space<vmem>>, %arg2: memref<64x32xbf16, #tpu.memory_space<vmem>>, %arg3: memref<1x32xf32, #tpu.memory_space<vmem>>, %arg4: memref<32x32xf32, #tpu.memory_space<vmem>>) attributes {dimension_semantics = [#tpu.dimension_semantics<parallel>], iteration_bounds = array<i64: 1>, scalar_prefetch = 0 : i64, scratch_operands = 0 : i64, tpu.core_type = #tpu.core_type<tc>, window_params = [{transform_indices = @transform_0, window_bounds = array<i64: 32, 64>}, {pipeline_mode = #tpu.pipeline_mode<synchronous>, transform_indices = @transform_1, window_bounds = array<i64: 64, 32>}, {pipeline_mode = #tpu.pipeline_mode<synchronous>, transform_indices = @transform_2, window_bounds = array<i64: 1, 32>}, {transform_indices = @transform_3, window_bounds = array<i64: 32, 32>}]} {
    %c0 = arith.constant 0 : index
    %c0_0 = arith.constant 0 : index
    %0 = vector.load %arg1[%c0, %c0_0] : memref<32x64xbf16, #tpu.memory_space<vmem>>, vector<32x64xbf16>
    %c0_1 = arith.constant 0 : index
    %c0_2 = arith.constant 0 : index
    %1 = vector.load %arg2[%c0_1, %c0_2] : memref<64x32xbf16, #tpu.memory_space<vmem>>, vector<64x32xbf16>
    %cst = arith.constant dense<0.000000e+00> : vector<32x32xf32>
    %2 = tpu.matmul %0, %1, %cst {dimension_numbers = #tpu.dot_dimension_numbers<[1], [0], [0], [1], [0, 0, 1, 1], [], []>} : vector<32x64xbf16>, vector<64x32xbf16>, vector<32x32xf32> -> vector<32x32xf32>
    %c0_3 = arith.constant 0 : index
    %c0_4 = arith.constant 0 : index
    %3 = vector.load %arg3[%c0_3, %c0_4] : memref<1x32xf32, #tpu.memory_space<vmem>>, vector<1x32xf32>
    %4 = vector.broadcast %3 : vector<1x32xf32> to vector<32x32xf32>
    %5 = arith.addf %2, %4 : vector<32x32xf32>
    %c0_5 = arith.constant 0 : index
    %c0_6 = arith.constant 0 : index
    %6 = vector.load %arg4[%c0_5, %c0_6] : memref<32x32xf32, #tpu.memory_space<vmem>>, vector<32x32xf32>
    tpu.vector_store %arg4[%c0_5, %c0_6], %5 {strides = array<i32>} : memref<32x32xf32, #tpu.memory_space<vmem>>, vector<32x32xf32>,
    return
  }
  func.func @transform_0(%arg0: i32) -> (i32, i32) {
    %c0_i32 = arith.constant 0 : i32
    %c0_i32_0 = arith.constant 0 : i32
    return %arg0, %c0_i32 : i32, i32
  }
  func.func @transform_1(%arg0: i32) -> (i32, i32) {
    %c0_i32 = arith.constant 0 : i32
    %c0_i32_0 = arith.constant 0 : i32
    %c0_i32_1 = arith.constant 0 : i32
    return %c0_i32, %c0_i32_0 : i32, i32
  }
  func.func @transform_2(%arg0: i32) -> (i32, i32) {
    %c0_i32 = arith.constant 0 : i32
    %c0_i32_0 = arith.constant 0 : i32
    %c0_i32_1 = arith.constant 0 : i32
    return %c0_i32, %c0_i32_0 : i32, i32
  }
  func.func @transform_3(%arg0: i32) -> (i32, i32) {
    %c0_i32 = arith.constant 0 : i32
    %c0_i32_0 = arith.constant 0 : i32
    return %arg0, %c0_i32 : i32, i32
  }
}

</mosaic_0001>

<llo_original>
// kernel: tpu_custom_call.1
$region0: #{tpu_custom_call.1}
  #allocation0 [shape = 'u32[]', space=smem, size = 0x4, offset = 0x4, fixed_abs, tag = 'smem constant byte address 0x4 - core index']
  #allocation1 [shape = 'u32[72,128]{1,0:T(1,128)}', space=vmem, size = 0x9000, scoped, tag = 'internal scratch']
  %s0 = inlined_call_operand.vmem [shape: bf16[32,64], index: 0, kind: input, shape index: {}]
  %s1 = inlined_call_operand.vmem [shape: bf16[64,32], index: 1, kind: input, shape index: {}]
  %s2 = inlined_call_operand.vmem [shape: f32[1,32], index: 2, kind: input, shape index: {}]
  %s3 = inlined_call_operand.hbm [shape: f32[32,32], index: 3, kind: output, shape index: {}]
  %s4 = sld [smem:[#allocation0]]
  $region22: #{tpu_custom_call.1} parent=0
    _
  %s6 = ssub.s32 1, %s4
  %s7 = scalar_select 0, %s6, %s4
  $region1: #{tpu_custom_call.1} parent=0
    #allocation2 [shape = 'u8[16384]{0}', space=vmem, size = 0x4000, scoped, tag = 'output window, operand 0, single buffered']
    #allocation3 [shape = 's32[1]{0}', space=sflag, size = 0x4, scoped, tag = 'scoped memory for tpu_custom_call.1']
    %8 = vsyncpa [#allocation3], 0
    // Predicated region
    $region2: #{tpu_custom_call.1} parent=1 // pred_check
      _
    $region3: #{tpu_custom_call.1} parent=1 // pred_check_branch
      %10 = sbr.rel (0) target = $region5
    $region4: #{tpu_custom_call.1} parent=1 // pred_region
      _
    $region5: #{tpu_custom_call.1} parent=1 // pred_fallthru
      _
    // Predicated region
    $region6: #{tpu_custom_call.1} parent=1 // pred_check
      _
    $region7: #{tpu_custom_call.1} parent=1 // pred_check_branch
      %12 = sbr.rel (0) target = $region9
    $region8: #{tpu_custom_call.1} parent=1 // pred_region
      _
    $region9: #{tpu_custom_call.1} parent=1 // pred_fallthru
      _
    // Predicated region
    $region10: #{tpu_custom_call.1} parent=1 // pred_check
      _
    $region11: #{tpu_custom_call.1} parent=1 // pred_check_branch
      %14 = sbr.rel (0) target = $region13
    $region12: #{tpu_custom_call.1} parent=1 // pred_region
      _
    $region13: #{tpu_custom_call.1} parent=1 // pred_fallthru
      _
    %v16 = vld [vmem:[%s0] sm:$0xf]
    %v17 = vld [vmem:[%s0 + $0x4] sm:$0xf]
    %v18 = vld [vmem:[%s0 + $0x8] sm:$0xf]
    %v19 = vld [vmem:[%s0 + $0xc] sm:$0xf]
    %v20 = vld [vmem:[%s1] sm:$0xf]
    %v21 = vld [vmem:[%s1 + $0x4] sm:$0xf]
    %v22 = vld [vmem:[%s1 + $0x8] sm:$0xf]
    %v23 = vld [vmem:[%s1 + $0xc] sm:$0xf]
    %v24 = vld [vmem:[%s1 + $0x10] sm:$0xf]
    %v25 = vld [vmem:[%s1 + $0x14] sm:$0xf]
    %v26 = vld [vmem:[%s1 + $0x18] sm:$0xf]
    %v27 = vld [vmem:[%s1 + $0x1c] sm:$0xf]
    %v28 = vld [vmem:[%s2] sm:$0x1]
    %v30 = vperm.slane %v28, 0
    %v36 = vunpack.c.l.b16 %v16
    %v37 = vunpack.c.l.b16 %v17
    %v38 = vunpack.c.l.b16 %v18
    %v39 = vunpack.c.l.b16 %v19
    %v40 = vpack.c.b16 %v37, %v36
    %v41 = vpack.c.b16 %v39, %v38
    %v50 = vunpack.c.l.b16 %v20
    %v51 = vunpack.c.l.b16 %v21
    %v52 = vunpack.c.l.b16 %v22
    %v53 = vunpack.c.l.b16 %v23
    %v54 = vunpack.c.l.b16 %v24
    %v55 = vunpack.c.l.b16 %v25
    %v56 = vunpack.c.l.b16 %v26
    %v57 = vunpack.c.l.b16 %v27
    %v58 = vpack.c.b16 %v51, %v50
    %v59 = vpack.c.b16 %v53, %v52
    %v60 = vpack.c.b16 %v55, %v54
    %v61 = vpack.c.b16 %v57, %v56
    %vm66 = vcmask 523264
    %v68 = vsel %vm66, %v40, 0
    %v71 = vsel %vm66, %v41, 0
    %73 = vmatpush.bf16.msra.mxu0 0
    %74 = vmatpush.bf16.msra.mxu0 0
    %75 = vmatpush.bf16.msra.mxu0 0
    %76 = vmatpush.bf16.msra.mxu0 0
    %77 = vmatpush.bf16.msra.mxu0 %v61
    %78 = vmatpush.bf16.msra.mxu0 %v60
    %79 = vmatpush.bf16.msra.mxu0 %v59
    %80 = vmatpush.bf16.msra.mxu0 %v58
    %81 = vmatmul.bf16.gmra.mxu0 %v68
    %v82 = vpop.f32.mrf.mxu0
    %v83 = vadd.f32 %v30, %v82
    %v84 = vpop.f32.mrf.mxu0
    %v85 = vadd.f32 %v30, %v84
    %86 = vmatmul.bf16.gmra.mxu0 %v71
    %v87 = vpop.f32.mrf.mxu0
    %v88 = vadd.f32 %v30, %v87
    %v89 = vpop.f32.mrf.mxu0
    %v90 = vadd.f32 %v30, %v89
    %91 = vdwg.mxu0
    %vm92 = vcmask 261120
    %93 = vst.msk [vmem:[#allocation2] sm:$0xff] %vm92, %v83
    %94 = vst.msk [vmem:[#allocation2 + $0x8] sm:$0xff] %vm92, %v85
    %95 = vst.msk [vmem:[#allocation2 + $0x10] sm:$0xff] %vm92, %v88
    %96 = vst.msk [vmem:[#allocation2 + $0x18] sm:$0xff] %vm92, %v90
    // Predicated region
    $region14: #{tpu_custom_call.1} parent=1 // pred_check
      _
    $region15: #{tpu_custom_call.1} parent=1 // pred_check_branch
      %98 = sbr.rel (0) target = $region17
    $region16: #{tpu_custom_call.1} parent=1 // pred_region
      %100 = vsyncadd [#allocation3], 0
      %s101 = sshll.u32 [#allocation2], 4
      %s102 = int_to_ptr.vmem [resolvable:$true] %s101
      %s103 = sshll.u32 %s3, 4
      %s104 = int_to_ptr.hbm [resolvable:$true] %s103
      %109 = dma.vmem_to_hbm [thread:$0]  %s102, 512, %s104, [#allocation3], 128, 128, 8
    $region17: #{tpu_custom_call.1} parent=1 // pred_fallthru
      _
    // Predicated region
    $region18: #{tpu_custom_call.1} parent=1 // pred_check
      _
    $region19: #{tpu_custom_call.1} parent=1 // pred_check_branch
      %111 = sbr.rel (0) target = $region21
    $region20: #{tpu_custom_call.1} parent=1 // pred_region
      %113 = dma.done [#allocation3], 512
    $region21: #{tpu_custom_call.1} parent=1 // pred_fallthru
      _
    %114 = vsyncpa [#allocation3], 1

</llo_original>
